<compile_context>
chip_gen: v6e
topology: v6e:2x2x1
jax: 0.10.0
libtpu: 0.0.40
codegen_flags: <defaults>
</compile_context>

<pallas_src>
import functools

import jax
import jax.numpy as jnp
from jax.experimental import pallas as pl
from jax.experimental.pallas import tpu as pltpu


def _pick_tile(n, max_tile):
    """Largest divisor of n <= max_tile, preferring multiples of 256/128/8."""
    if n <= max_tile:
        return n
    for step in (256, 128, 8):
        start = max_tile - (max_tile % step)
        for cand in range(start, step - 1, -step):
            if cand > 0 and n % cand == 0:
                return cand
    # TODO(synk): ragged-tile masking for n with no suitable divisor.
    return n


# ---------------------------------------------------------------------------
# Pass 1: projection head + fused L2 normalize + 1/sqrt(tau) scaling.
# ---------------------------------------------------------------------------
def _proj_kernel(x_ref, w1_ref, b1_ref, w2_ref, b2_ref, xn_ref, *, inv_sqrt_tau):
    # Dropouts are identity (eval mode).
    # TODO(synk): training-mode dropout (pltpu.prng_* masks) not implemented.
    x = x_ref[...].astype(jnp.bfloat16)
    h = jnp.dot(x, w1_ref[...], preferred_element_type=jnp.float32) + b1_ref[...]
    h = jnp.maximum(h, 0.0)
    h = jnp.dot(h.astype(jnp.bfloat16), w2_ref[...],
                preferred_element_type=jnp.float32) + b2_ref[...]
    # F.normalize(p=2, dim=1, eps=1e-12) fused with /sqrt(tau):
    #   h / max(||h||, 1e-12) == h * rsqrt(max(||h||^2, 1e-24))
    sq = jnp.sum(h * h, axis=1, keepdims=True)
    inv = jax.lax.rsqrt(jnp.maximum(sq, 1e-24)) * inv_sqrt_tau
    xn_ref[...] = (h * inv).astype(xn_ref.dtype)


# ---------------------------------------------------------------------------
# Pass 2: flash-style masked log-sum-exp (denominator only; numerator hoisted).
# ---------------------------------------------------------------------------
def _lse_kernel(xq_ref, xk_ref, lse_ref, m_sc, l_sc, *, tm, tn):
    i = pl.program_id(0)   # query-row tile   ("parallel")
    j = pl.program_id(1)   # key-column tile  ("arbitrary" reduction)

    @pl.when(j == 0)
    def _():
        m_sc[...] = jnp.full_like(m_sc, -jnp.inf)
        l_sc[...] = jnp.zeros_like(l_sc)

    # sim tile: contract both bf16 operands on the feature axis (no transpose),
    # accumulate in f32 on the MXU.
    sim = jax.lax.dot_general(
        xq_ref[...], xk_ref[...],
        dimension_numbers=(((1,), (1,)), ((), ())),
        preferred_element_type=jnp.float32)

    def _update(s):
        # Online max / log-sum-exp (softmax denominator only; no logprob matrix).
        m_prev = m_sc[...]
        m_new = jnp.maximum(m_prev, jnp.max(s, axis=1, keepdims=True))
        l_sc[...] = (jnp.exp(m_prev - m_new) * l_sc[...]
                     + jnp.sum(jnp.exp(s - m_new), axis=1, keepdims=True))
        m_sc[...] = m_new

    # Only tiles that intersect the diagonal pay for the iota/compare/select.
    hits_diag = jnp.logical_and(i * tm < (j + 1) * tn, j * tn < (i + 1) * tm)

    @pl.when(hits_diag)
    def _():
        rows = i * tm + jax.lax.broadcasted_iota(jnp.int32, (tm, tn), 0)
        cols = j * tn + jax.lax.broadcasted_iota(jnp.int32, (tm, tn), 1)
        _update(jnp.where(rows == cols, jnp.float32(-1e9), sim))

    @pl.when(jnp.logical_not(hits_diag))
    def _():
        _update(sim)

    @pl.when(j == pl.num_programs(1) - 1)
    def _():
        lse_ref[...] = m_sc[...] + jnp.log(l_sc[...])


# ---------------------------------------------------------------------------
# Wrapper
# ---------------------------------------------------------------------------
def ntxent_loss(x, w1, b1, w2, b2, tau=1.0):
    """x: (n, hidden) f32. Weights (in, out) pre-transposed, biases (1, out)."""
    n, hidden = x.shape
    assert n % 2 == 0, "NT-Xent with m=2 requires an even batch"
    assert tau > 1e-6, "diagonal mask (-1e9) requires |sim| = 1/tau << 1e9"

    # Per-generation VMEM budget (~100 MiB v5e/v6e, ~54 MiB v7x), with headroom.
    try:
        vmem_cap = int(pltpu.get_tpu_info().vmem_capacity_bytes)
    except Exception:
        vmem_cap = 64 * 1024 * 1024
    vmem_limit = min(int(vmem_cap * 0.85), 100 * 1024 * 1024)

    # bf16 weights: cast once here, never per grid step in the kernel.
    # TODO(synk): for hidden >= ~2896 on v7x (64 MiB VMEM), additionally tile
    # the second matmul's output dim so the resident weights fit.
    w1b = w1.astype(jnp.bfloat16)
    w2b = w2.astype(jnp.bfloat16)

    tp = _pick_tile(n, 256)   # projection row tile

    # ---- pass 1: xn = normalize(MLP(x)) / sqrt(tau), stored once (bf16) ----
    proj = functools.partial(_proj_kernel, inv_sqrt_tau=float(tau) ** -0.5)
    xn = pl.pallas_call(
        proj,
        out_shape=jax.ShapeDtypeStruct((n, hidden), jnp.bfloat16),
        grid=(n // tp,),
        in_specs=[
            pl.BlockSpec((tp, hidden), lambda i: (i, 0)),
            pl.BlockSpec((hidden, hidden), lambda i: (0, 0)),   # w1 resident (bf16)
            pl.BlockSpec((1, hidden), lambda i: (0, 0)),        # b1 resident (f32)
            pl.BlockSpec((hidden, hidden), lambda i: (0, 0)),   # w2 resident (bf16)
            pl.BlockSpec((1, hidden), lambda i: (0, 0)),        # b2 resident (f32)
        ],
        out_specs=pl.BlockSpec((tp, hidden), lambda i: (i, 0)),
        compiler_params=pltpu.CompilerParams(
            dimension_semantics=("parallel",),
            vmem_limit_bytes=vmem_limit),
    )(x, w1b, b1, w2b, b2)

    # ---- numerator hoist (tiny XLA op): num[i] = <xn_i, xn_{(i+n/2)%n}> ----
    # Matches the PyTorch label convention: labels[r] = (r + n//2) % n (m=2).
    xn32 = xn.astype(jnp.float32)
    num = jnp.sum(xn32 * jnp.roll(xn32, -(n // 2), axis=0), axis=1)     # (n,)

    # Pad the feature (lane / MXU-K) dim to a multiple of 128 for pass 2;
    # zero columns do not change the dot products.
    hidden_p = ((hidden + 127) // 128) * 128
    xk = xn if hidden_p == hidden else jnp.pad(xn, ((0, 0), (0, hidden_p - hidden)))

    tm = _pick_tile(n, 512)   # sim query-row tile (bigger tile => fewer key re-streams)
    # Keep the key matrix fully VMEM-resident when its double-buffered bf16
    # footprint fits ~1/3 of the budget; else fall back to 512-column tiles.
    if 2 * n * hidden_p * 2 <= vmem_limit // 3:
        tn = n
    else:
        tn = _pick_tile(n, 512)

    # ---- pass 2: flash-style masked log-sum-exp per row ----
    kern = functools.partial(_lse_kernel, tm=tm, tn=tn)
    lse = pl.pallas_call(
        kern,
        out_shape=jax.ShapeDtypeStruct((n, 1), jnp.float32),
        grid=(n // tm, n // tn),
        in_specs=[
            pl.BlockSpec((tm, hidden_p), lambda i, j: (i, 0)),   # query rows
            pl.BlockSpec((tn, hidden_p), lambda i, j: (j, 0)),   # key rows (resident if tn==n)
        ],
        out_specs=pl.BlockSpec((tm, 1), lambda i, j: (i, 0)),
        scratch_shapes=[
            pltpu.VMEM((tm, 1), jnp.float32),   # running max
            pltpu.VMEM((tm, 1), jnp.float32),   # running sum(exp)
        ],
        compiler_params=pltpu.CompilerParams(
            dimension_semantics=("parallel", "arbitrary"),
            vmem_limit_bytes=vmem_limit),
    )(xk, xk)

    # loss = sum_i (lse_i - sim[i, label_i]) / n / (m-1) / norm, m=2, norm=1.
    return jnp.sum(lse[:, 0] - num) / jnp.float32(n)


def ntxent_ref(x, w1, b1, w2, b2, tau=1.0):
    """Pure-JAX f32 reference for correctness check."""
    h = jnp.maximum(x @ w1 + b1, 0.0)
    h = h @ w2 + b2
    nrm = jnp.maximum(jnp.linalg.norm(h, axis=1, keepdims=True), 1e-12)
    xn = h / nrm / jnp.sqrt(tau)
    sim = xn @ xn.T
    n = x.shape[0]
    sim = sim.at[jnp.arange(n), jnp.arange(n)].set(-1e9)
    logprob = jax.nn.log_softmax(sim, axis=1)
    labels = (jnp.arange(n) + n // 2) % n
    return -logprob[jnp.arange(n), labels].sum() / n


if __name__ == "__main__":
    n = 8          # batch (two augmented views, m = 2 -> must be even)
    hidden = 32    # config.hidden_size
    tau = 1.0

    key = jax.random.PRNGKey(0)
    kx, kw1, kb1, kw2, kb2 = jax.random.split(key, 5)

    x = jax.random.normal(kx, (n, hidden), dtype=jnp.float32)
    bound = 1.0 / jnp.sqrt(hidden)
    w1 = jax.random.uniform(kw1, (hidden, hidden), jnp.float32, -bound, bound)
    b1 = jax.random.uniform(kb1, (1, hidden), jnp.float32, -bound, bound)
    w2 = jax.random.uniform(kw2, (hidden, hidden), jnp.float32, -bound, bound)
    b2 = jax.random.uniform(kb2, (1, hidden), jnp.float32, -bound, bound)

    loss = jax.block_until_ready(ntxent_loss(x, w1, b1, w2, b2, tau=tau))
    ref = jax.block_until_ready(ntxent_ref(x, w1, b1, w2, b2, tau=tau))

    assert jnp.isfinite(loss), "non-finite loss"
    # bf16 MXU operands -> loosened tolerance vs. the f32 reference.
    assert jnp.allclose(loss, ref, rtol=5e-2, atol=5e-2), (loss, ref)
    print("KERNEL_OK")
</pallas_src>

<mosaic_0001>
module attributes {stable_mosaic.version = 11 : i64} {
  func.func @_proj_kernel(%arg0: i32, %arg1: memref<8x32xf32, #tpu.memory_space<vmem>>, %arg2: memref<32x32xbf16, #tpu.memory_space<vmem>>, %arg3: memref<1x32xf32, #tpu.memory_space<vmem>>, %arg4: memref<32x32xbf16, #tpu.memory_space<vmem>>, %arg5: memref<1x32xf32, #tpu.memory_space<vmem>>, %arg6: memref<8x32xbf16, #tpu.memory_space<vmem>>) attributes {dimension_semantics = [#tpu.dimension_semantics<parallel>], iteration_bounds = array<i64: 1>, scalar_prefetch = 0 : i64, scratch_operands = 0 : i64, tpu.core_type = #tpu.core_type<tc>, window_params = [{transform_indices = @transform_0, window_bounds = array<i64: 8, 32>}, {pipeline_mode = #tpu.pipeline_mode<synchronous>, transform_indices = @transform_1, window_bounds = array<i64: 32, 32>}, {pipeline_mode = #tpu.pipeline_mode<synchronous>, transform_indices = @transform_2, window_bounds = array<i64: 1, 32>}, {pipeline_mode = #tpu.pipeline_mode<synchronous>, transform_indices = @transform_3, window_bounds = array<i64: 32, 32>}, {pipeline_mode = #tpu.pipeline_mode<synchronous>, transform_indices = @transform_4, window_bounds = array<i64: 1, 32>}, {transform_indices = @transform_5, window_bounds = array<i64: 8, 32>}]} {
    %c0 = arith.constant 0 : index
    %c0_0 = arith.constant 0 : index
    %0 = vector.load %arg1[%c0, %c0_0] : memref<8x32xf32, #tpu.memory_space<vmem>>, vector<8x32xf32>
    %1 = arith.truncf %0 : vector<8x32xf32> to vector<8x32xbf16>
    %c0_1 = arith.constant 0 : index
    %c0_2 = arith.constant 0 : index
    %2 = vector.load %arg2[%c0_1, %c0_2] : memref<32x32xbf16, #tpu.memory_space<vmem>>, vector<32x32xbf16>
    %cst = arith.constant dense<0.000000e+00> : vector<8x32xf32>
    %3 = tpu.matmul %1, %2, %cst {dimension_numbers = #tpu.dot_dimension_numbers<[1], [0], [0], [1], [0, 0, 1, 1], [], []>} : vector<8x32xbf16>, vector<32x32xbf16>, vector<8x32xf32> -> vector<8x32xf32>
    %c0_3 = arith.constant 0 : index
    %c0_4 = arith.constant 0 : index
    %4 = vector.load %arg3[%c0_3, %c0_4] : memref<1x32xf32, #tpu.memory_space<vmem>>, vector<1x32xf32>
    %5 = vector.broadcast %4 : vector<1x32xf32> to vector<8x32xf32>
    %6 = arith.addf %3, %5 : vector<8x32xf32>
    %cst_5 = arith.constant 0.000000e+00 : f32
    %7 = vector.broadcast %cst_5 : f32 to vector<8x32xf32>
    %8 = arith.maximumf %6, %7 : vector<8x32xf32>
    %9 = arith.truncf %8 : vector<8x32xf32> to vector<8x32xbf16>
    %c0_6 = arith.constant 0 : index
    %c0_7 = arith.constant 0 : index
    %10 = vector.load %arg4[%c0_6, %c0_7] : memref<32x32xbf16, #tpu.memory_space<vmem>>, vector<32x32xbf16>
    %cst_8 = arith.constant dense<0.000000e+00> : vector<8x32xf32>
    %11 = tpu.matmul %9, %10, %cst_8 {dimension_numbers = #tpu.dot_dimension_numbers<[1], [0], [0], [1], [0, 0, 1, 1], [], []>} : vector<8x32xbf16>, vector<32x32xbf16>, vector<8x32xf32> -> vector<8x32xf32>
    %c0_9 = arith.constant 0 : index
    %c0_10 = arith.constant 0 : index
    %12 = vector.load %arg5[%c0_9, %c0_10] : memref<1x32xf32, #tpu.memory_space<vmem>>, vector<1x32xf32>
    %13 = vector.broadcast %12 : vector<1x32xf32> to vector<8x32xf32>
    %14 = arith.addf %11, %13 : vector<8x32xf32>
    %15 = arith.mulf %14, %14 : vector<8x32xf32>
    %cst_11 = arith.constant dense<0.000000e+00> : vector<8xf32>
    %16 = vector.multi_reduction <add>, %15, %cst_11 [1] : vector<8x32xf32> to vector<8xf32>
    %17 = vector.shape_cast %16 : vector<8xf32> to vector<8x1xf32>
    %cst_12 = arith.constant 1.000000e-24 : f32
    %18 = vector.broadcast %cst_12 : f32 to vector<8x1xf32>
    %19 = arith.maximumf %17, %18 : vector<8x1xf32>
    %20 = math.rsqrt %19 : vector<8x1xf32>
    %cst_13 = arith.constant 1.000000e+00 : f32
    %21 = vector.broadcast %cst_13 : f32 to vector<8x1xf32>
    %22 = arith.mulf %20, %21 : vector<8x1xf32>
    %23 = vector.broadcast %22 : vector<8x1xf32> to vector<8x32xf32>
    %24 = arith.mulf %14, %23 : vector<8x32xf32>
    %25 = arith.truncf %24 : vector<8x32xf32> to vector<8x32xbf16>
    %c0_14 = arith.constant 0 : index
    %c0_15 = arith.constant 0 : index
    %26 = vector.load %arg6[%c0_14, %c0_15] : memref<8x32xbf16, #tpu.memory_space<vmem>>, vector<8x32xbf16>
    tpu.vector_store %arg6[%c0_14, %c0_15], %25 {strides = array<i32>} : memref<8x32xbf16, #tpu.memory_space<vmem>>, vector<8x32xbf16>,
    return
  }
  func.func @transform_0(%arg0: i32) -> (i32, i32) {
    %c0_i32 = arith.constant 0 : i32
    %c0_i32_0 = arith.constant 0 : i32
    return %arg0, %c0_i32 : i32, i32
  }
  func.func @transform_1(%arg0: i32) -> (i32, i32) {
    %c0_i32 = arith.constant 0 : i32
    %c0_i32_0 = arith.constant 0 : i32
    %c0_i32_1 = arith.constant 0 : i32
    return %c0_i32, %c0_i32_0 : i32, i32
  }
  func.func @transform_2(%arg0: i32) -> (i32, i32) {
    %c0_i32 = arith.constant 0 : i32
    %c0_i32_0 = arith.constant 0 : i32
    %c0_i32_1 = arith.constant 0 : i32
    return %c0_i32, %c0_i32_0 : i32, i32
  }
  func.func @transform_3(%arg0: i32) -> (i32, i32) {
    %c0_i32 = arith.constant 0 : i32
    %c0_i32_0 = arith.constant 0 : i32
    %c0_i32_1 = arith.constant 0 : i32
    return %c0_i32, %c0_i32_0 : i32, i32
  }
  func.func @transform_4(%arg0: i32) -> (i32, i32) {
    %c0_i32 = arith.constant 0 : i32
    %c0_i32_0 = arith.constant 0 : i32
    %c0_i32_1 = arith.constant 0 : i32
    return %c0_i32, %c0_i32_0 : i32, i32
  }
  func.func @transform_5(%arg0: i32) -> (i32, i32) {
    %c0_i32 = arith.constant 0 : i32
    %c0_i32_0 = arith.constant 0 : i32
    return %arg0, %c0_i32 : i32, i32
  }
}

</mosaic_0001>

<llo_original>
// kernel: tpu_custom_call.1
$region0: #{tpu_custom_call.1}
  #allocation0 [shape = 'u32[]', space=smem, size = 0x4, offset = 0x4, fixed_abs, tag = 'smem constant byte address 0x4 - core index']
  #allocation1 [shape = 'u32[144,128]{1,0:T(1,128)}', space=vmem, size = 0x12000, scoped, tag = 'internal scratch']
  %s0 = inlined_call_operand.hbm [shape: f32[8,32], index: 0, kind: input, shape index: {}]
  %s1 = inlined_call_operand.hbm [shape: bf16[32,32], index: 1, kind: input, shape index: {}]
  %s2 = inlined_call_operand.vmem [shape: f32[1,32], index: 2, kind: input, shape index: {}]
  %s3 = inlined_call_operand.hbm [shape: bf16[32,32], index: 3, kind: input, shape index: {}]
  %s4 = inlined_call_operand.vmem [shape: f32[1,32], index: 4, kind: input, shape index: {}]
  %s5 = inlined_call_operand.hbm [shape: bf16[8,32], index: 5, kind: output, shape index: {}]
  %s6 = sld [smem:[#allocation0]]
  $region42: #{tpu_custom_call.1} parent=0
    _
  %s8 = ssub.s32 1, %s6
  %s9 = scalar_select 0, %s8, %s6
  $region1: #{tpu_custom_call.1} parent=0
    #allocation2 [shape = 'u8[4096]{0}', space=vmem, size = 0x1000, scoped, tag = 'input window, operand 0, single buffered']
    #allocation3 [shape = 's32[1]{0}', space=sflag, size = 0x4, scoped, tag = 'scoped memory for tpu_custom_call.1']
    #allocation4 [shape = 's32[1]{0}', space=sflag, size = 0x4, scoped, tag = 'scoped memory for tpu_custom_call.1']
    #allocation5 [shape = 'u8[8192]{0}', space=vmem, size = 0x2000, scoped, tag = 'input window, operand 1, single buffered']
    #allocation6 [shape = 's32[1]{0}', space=sflag, size = 0x4, scoped, tag = 'scoped memory for tpu_custom_call.1']
    #allocation7 [shape = 'u8[8192]{0}', space=vmem, size = 0x2000, scoped, tag = 'input window, operand 3, single buffered']
    #allocation8 [shape = 'u8[2048]{0}', space=vmem, size = 0x800, scoped, tag = 'output window, operand 0, single buffered']
    %10 = vsyncpa [#allocation3], 0
    %11 = vsyncpa [#allocation6], 0
    %12 = vsyncpa [#allocation4], 0
    // Predicated region
    $region2: #{tpu_custom_call.1} parent=1 // pred_check
      _
    $region3: #{tpu_custom_call.1} parent=1 // pred_check_branch
      %14 = sbr.rel (0) target = $region5
    $region4: #{tpu_custom_call.1} parent=1 // pred_region
      %s16 = ssub.s32 128, 128
      %17 = vsyncadd [#allocation3], %s16
      %s19 = sshll.u32 [#allocation2], 4
      %s20 = int_to_ptr.vmem [resolvable:$true] %s19
      %22 = dma.hbm_to_vmem [thread:$0]  %s0, 128, %s20, [#allocation3]
    $region5: #{tpu_custom_call.1} parent=1 // pred_fallthru
      _
    // Predicated region
    $region6: #{tpu_custom_call.1} parent=1 // pred_check
      _
    $region7: #{tpu_custom_call.1} parent=1 // pred_check_branch
      %24 = sbr.rel (0) target = $region9
    $region8: #{tpu_custom_call.1} parent=1 // pred_region
      %s26 = ssub.s32 256, 256
      %27 = vsyncadd [#allocation6], %s26
      %s28 = sshll.u32 [#allocation5], 4
      %s29 = int_to_ptr.vmem [resolvable:$true] %s28
      %34 = dma.hbm_to_vmem [thread:$0]  %s1, 256, %s29, [#allocation6], 64, 64, 4
    $region9: #{tpu_custom_call.1} parent=1 // pred_fallthru
      _
    // Predicated region
    $region10: #{tpu_custom_call.1} parent=1 // pred_check
      _
    $region11: #{tpu_custom_call.1} parent=1 // pred_check_branch
      %36 = sbr.rel (0) target = $region13
    $region12: #{tpu_custom_call.1} parent=1 // pred_region
      _
    $region13: #{tpu_custom_call.1} parent=1 // pred_fallthru
      _
    // Predicated region
    $region14: #{tpu_custom_call.1} parent=1 // pred_check
      _
    $region15: #{tpu_custom_call.1} parent=1 // pred_check_branch
      %38 = sbr.rel (0) target = $region17
    $region16: #{tpu_custom_call.1} parent=1 // pred_region
      %s40 = ssub.s32 256, 256
      %41 = vsyncadd [#allocation6], %s40
      %s42 = sshll.u32 [#allocation7], 4
      %s43 = int_to_ptr.vmem [resolvable:$true] %s42
      %48 = dma.hbm_to_vmem [thread:$0]  %s3, 256, %s43, [#allocation6], 64, 64, 4
    $region17: #{tpu_custom_call.1} parent=1 // pred_fallthru
      _
    // Predicated region
    $region18: #{tpu_custom_call.1} parent=1 // pred_check
      _
    $region19: #{tpu_custom_call.1} parent=1 // pred_check_branch
      %50 = sbr.rel (0) target = $region21
    $region20: #{tpu_custom_call.1} parent=1 // pred_region
      _
    $region21: #{tpu_custom_call.1} parent=1 // pred_fallthru
      _
    // Predicated region
    $region22: #{tpu_custom_call.1} parent=1 // pred_check
      _
    $region23: #{tpu_custom_call.1} parent=1 // pred_check_branch
      %52 = sbr.rel (0) target = $region25
    $region24: #{tpu_custom_call.1} parent=1 // pred_region
      %53 = dma.done [#allocation3], 128
    $region25: #{tpu_custom_call.1} parent=1 // pred_fallthru
      _
    // Predicated region
    $region26: #{tpu_custom_call.1} parent=1 // pred_check
      _
    $region27: #{tpu_custom_call.1} parent=1 // pred_check_branch
      %55 = sbr.rel (0) target = $region29
    $region28: #{tpu_custom_call.1} parent=1 // pred_region
      %56 = dma.done [#allocation6], 256
    $region29: #{tpu_custom_call.1} parent=1 // pred_fallthru
      _
    // Predicated region
    $region30: #{tpu_custom_call.1} parent=1 // pred_check
      _
    $region31: #{tpu_custom_call.1} parent=1 // pred_check_branch
      %58 = sbr.rel (0) target = $region33
    $region32: #{tpu_custom_call.1} parent=1 // pred_region
      %59 = dma.done [#allocation6], 256
    $region33: #{tpu_custom_call.1} parent=1 // pred_fallthru
      _
    %v61 = vld [vmem:[#allocation2] sm:$0xff]
    %v62 = vpack.c.bf16 %v61, %v61
    %v63 = vld [vmem:[#allocation5] sm:$0xf]
    %v64 = vld [vmem:[#allocation5 + $0x4] sm:$0xf]
    %v65 = vld [vmem:[#allocation5 + $0x8] sm:$0xf]
    %v66 = vld [vmem:[#allocation5 + $0xc] sm:$0xf]
    %v67 = vld [vmem:[%s2] sm:$0x1]
    %v69 = vlaneseq
    %v70 = vshrl.u32 %v69, 7
    %v71 = vsub.s32 0, %v70
    %v72 = vrot.slane %v67, %v71
    %v78 = vunpack.c.l.b16 %v63
    %v79 = vunpack.c.l.b16 %v64
    %v80 = vunpack.c.l.b16 %v65
    %v81 = vunpack.c.l.b16 %v66
    %v82 = vpack.c.b16 %v79, %v78
    %v83 = vpack.c.b16 %v81, %v80
    %vm86 = vcmask 261120
    %v88 = vsel %vm86, %v62, 0
    %90 = vmatprep.subr.bf16.mxu0 0
    %91 = vmatpush1.bf16.msra.mxu0 0
    %92 = vmatprep.subr.bf16.mxu0 0
    %93 = vmatpush1.bf16.msra.mxu0 0
    %94 = vmatprep.subr.bf16.mxu0 0
    %95 = vmatpush1.bf16.msra.mxu0 0
    %96 = vmatprep.subr.bf16.mxu0 0
    %97 = vmatpush1.bf16.msra.mxu0 0
    %98 = vmatprep.subr.bf16.mxu0 0
    %99 = vmatpush1.bf16.msra.mxu0 0
    %100 = vmatprep.subr.bf16.mxu0 0
    %101 = vmatpush1.bf16.msra.mxu0 0
    %102 = vmatprep.subr.bf16.mxu0 0
    %103 = vmatpush1.bf16.msra.mxu0 %v83
    %104 = vmatprep.subr.bf16.mxu0 0
    %105 = vmatpush1.bf16.msra.mxu0 %v82
    %106 = vmatprep.subr.bf16.mxu0 0
    %107 = vmatpush2.bf16.msra.mxu0 0
    %108 = vmatprep.subr.bf16.mxu0 0
    %109 = vmatpush2.bf16.msra.mxu0 0
    %110 = vmatprep.subr.bf16.mxu0 0
    %111 = vmatpush2.bf16.msra.mxu0 0
    %112 = vmatprep.subr.bf16.mxu0 0
    %113 = vmatpush2.bf16.msra.mxu0 0
    %114 = vmatprep.subr.bf16.mxu0 0
    %115 = vmatpush2.bf16.msra.mxu0 0
    %116 = vmatprep.subr.bf16.mxu0 0
    %117 = vmatpush2.bf16.msra.mxu0 0
    %118 = vmatprep.subr.bf16.mxu0 0
    %119 = vmatpush2.bf16.msra.mxu0 0
    %120 = vmatprep.subr.bf16.mxu0 0
    %121 = vmatpush2.bf16.msra.mxu0 0
    %122 = vmatprep.mubr.bf16.mxu0 0
    %123 = vmatmul.mubr.bf16.gmra.mxu0 %v88
    %v124 = vpop.f32.mrf.mxu0
    %v125 = vadd.f32 %v72, %v124
    %v126 = vpop.f32.mrf.mxu0
    %v127 = vpop.f32.mrf.mxu0
    %v128 = vpop.f32.mrf.mxu0
    %129 = vdwg.mxu0
    %v130 = vmax.f32 %v125, 0.0
    %v131 = vpack.c.bf16 %v130, %v130
    %v132 = vld [vmem:[#allocation7] sm:$0xf]
    %v133 = vld [vmem:[#allocation7 + $0x4] sm:$0xf]
    %v134 = vld [vmem:[#allocation7 + $0x8] sm:$0xf]
    %v135 = vld [vmem:[#allocation7 + $0xc] sm:$0xf]
    %v136 = vld [vmem:[%s4] sm:$0x1]
    %v138 = vlaneseq
    %v139 = vshrl.u32 %v138, 7
    %v140 = vsub.s32 0, %v139
    %v141 = vrot.slane %v136, %v140
    %v147 = vunpack.c.l.b16 %v132
    %v148 = vunpack.c.l.b16 %v133
    %v149 = vunpack.c.l.b16 %v134
    %v150 = vunpack.c.l.b16 %v135
    %v151 = vpack.c.b16 %v148, %v147
    %v152 = vpack.c.b16 %v150, %v149
    %v156 = vsel %vm86, %v131, 0
    %158 = vmatprep.subr.bf16.mxu0 0
    %159 = vmatpush1.bf16.msra.mxu0 0
    %160 = vmatprep.subr.bf16.mxu0 0
    %161 = vmatpush1.bf16.msra.mxu0 0
    %162 = vmatprep.subr.bf16.mxu0 0
    %163 = vmatpush1.bf16.msra.mxu0 0
    %164 = vmatprep.subr.bf16.mxu0 0
    %165 = vmatpush1.bf16.msra.mxu0 0
    %166 = vmatprep.subr.bf16.mxu0 0
    %167 = vmatpush1.bf16.msra.mxu0 0
    %168 = vmatprep.subr.bf16.mxu0 0
    %169 = vmatpush1.bf16.msra.mxu0 0
    %170 = vmatprep.subr.bf16.mxu0 0
    %171 = vmatpush1.bf16.msra.mxu0 %v152
    %172 = vmatprep.subr.bf16.mxu0 0
    %173 = vmatpush1.bf16.msra.mxu0 %v151
    %174 = vmatprep.subr.bf16.mxu0 0
    %175 = vmatpush2.bf16.msra.mxu0 0
    %176 = vmatprep.subr.bf16.mxu0 0
    %177 = vmatpush2.bf16.msra.mxu0 0
    %178 = vmatprep.subr.bf16.mxu0 0
    %179 = vmatpush2.bf16.msra.mxu0 0
    %180 = vmatprep.subr.bf16.mxu0 0
    %181 = vmatpush2.bf16.msra.mxu0 0
    %182 = vmatprep.subr.bf16.mxu0 0
    %183 = vmatpush2.bf16.msra.mxu0 0
    %184 = vmatprep.subr.bf16.mxu0 0
    %185 = vmatpush2.bf16.msra.mxu0 0
    %186 = vmatprep.subr.bf16.mxu0 0
    %187 = vmatpush2.bf16.msra.mxu0 0
    %188 = vmatprep.subr.bf16.mxu0 0
    %189 = vmatpush2.bf16.msra.mxu0 0
    %190 = vmatprep.mubr.bf16.mxu0 0
    %191 = vmatmul.mubr.bf16.gmra.mxu0 %v156
    %v192 = vpop.f32.mrf.mxu0
    %v193 = vadd.f32 %v141, %v192
    %v194 = vpop.f32.mrf.mxu0
    %v195 = vpop.f32.mrf.mxu0
    %v196 = vpop.f32.mrf.mxu0
    %197 = vdwg.mxu0
    %v198 = vmul.f32 %v193, %v193
    %v199 = vsel %vm86, %v198, 0.0
    %200 = vadd.xlane.f32.xlu0 %v199
    %v201 = vpop.xlane.xlu0 %200
    %v202 = vmax.f32 %v201, 1e-24
    %v203 = vrsqrt.pop %v202
    %v204 = vmul.f32 %v193, %v203
    %v205 = vpack.c.bf16 %v204, %v204
    %vm206 = vcmask 257024
    %207 = vst.msk [vmem:[#allocation8] sm:$0xf] %vm206, %v205
    // Predicated region
    $region34: #{tpu_custom_call.1} parent=1 // pred_check
      _
    $region35: #{tpu_custom_call.1} parent=1 // pred_check_branch
      %209 = sbr.rel (0) target = $region37
    $region36: #{tpu_custom_call.1} parent=1 // pred_region
      %s211 = ssub.s32 64, 64
      %212 = vsyncadd [#allocation4], %s211
      %s214 = sshll.u32 [#allocation8], 4
      %s215 = int_to_ptr.vmem [resolvable:$true] %s214
      %217 = dma.vmem_to_hbm [thread:$0]  %s215, 64, %s5, [#allocation4]
    $region37: #{tpu_custom_call.1} parent=1 // pred_fallthru
      _
    // Predicated region
    $region38: #{tpu_custom_call.1} parent=1 // pred_check
      _
    $region39: #{tpu_custom_call.1} parent=1 // pred_check_branch
      %219 = sbr.rel (0) target = $region41
    $region40: #{tpu_custom_call.1} parent=1 // pred_region
      %220 = dma.done [#allocation4], 64
    $region41: #{tpu_custom_call.1} parent=1 // pred_fallthru
      _
    %221 = vsyncpa [#allocation3], 1
    %222 = vsyncpa [#allocation6], 1
    %223 = vsyncpa [#allocation4], 1

</llo_original>
